<compile_context>
chip_gen: v6e
topology: v6e:2x2x1
jax: 0.10.0
libtpu: 0.0.40
codegen_flags: <defaults>
</compile_context>

<pallas_src>
import jax
import jax.numpy as jnp
from jax.experimental import pallas as pl
from jax.experimental.pallas import tpu as pltpu


def _round_up(x, m):
    return (x + m - 1) // m * m


def _gcl_lse_kernel(x_ref, embt_ref, out_ref, m_ref, l_ref):
    """One (row-tile, N-block) step of  logsumexp_j  -(|s|*||x-e_j||^2 + b).

    x_ref    : (TT, Dp)   rows = [x, |s|*||x||^2, 1, 0...]  over flattened B*T*S
    embt_ref : (Dp, NB)   cols = [2|s|*e_j ; -1 ; -(|s|*||e_j||^2 + b) ; 0...]
                          (padded speaker columns carry -1e30 in the "-c" row)
    out_ref  : (1, 1, TT) per-row logsumexp, written on the last N block
    m_ref/l_ref : (TT,1)  f32 online-logsumexp running max / running sum
    """
    k = pl.program_id(1)
    nk = pl.num_programs(1)

    @pl.when(k == 0)
    def _():
        m_ref[...] = jnp.full_like(m_ref, -jnp.inf)
        l_ref[...] = jnp.zeros_like(l_ref)

    # Fully folded logits straight off the MXU:
    #   neg_j = 2|s| x.e_j - |s|||x||^2 - (|s|||e_j||^2 + b) = -(|s|||x-e_j||^2 + b)
    neg = jnp.dot(x_ref[...], embt_ref[...], preferred_element_type=jnp.float32)

    # online logsumexp across N blocks
    m_prev = m_ref[...]
    m_new = jnp.maximum(m_prev, jnp.max(neg, axis=-1, keepdims=True))
    alpha = jnp.exp(m_prev - m_new)
    l_ref[...] = alpha * l_ref[...] + jnp.sum(jnp.exp(neg - m_new),
                                              axis=-1, keepdims=True)
    m_ref[...] = m_new

    @pl.when(k == nk - 1)
    def _():
        lse = m_ref[...] + jnp.log(l_ref[...])            # (TT, 1)
        out_ref[...] = lse.T.reshape(1, 1, -1)            # lane-dense (1,1,TT)


def global_classification_loss(
    speaker_vector,
    speaker_embedding,
    all_speaker_embedding,
    scale,
    bias,
    *,
    source_reduction="mean",
    feature_last=True,
    batch_mean=True,
    time_mean=True,
    row_tile=256,
    n_block=None,
    input_dtype=None,
):
    if not feature_last:
        # (B, S, D, T) -> (B, T, S, D)
        speaker_vector = jnp.transpose(speaker_vector, (0, 3, 1, 2))

    B, T, S, D = speaker_vector.shape
    N, D2 = all_speaker_embedding.shape
    assert D2 == D

    scale = jnp.asarray(scale, jnp.float32)
    bias = jnp.asarray(bias, jnp.float32)
    s_abs = jnp.abs(scale)

    # ---- target-distance term: O(M*D), exact f32, done in XLA glue ---------
    sv32 = speaker_vector.astype(jnp.float32)                        # (B,T,S,D)
    diff = sv32 - speaker_embedding.astype(jnp.float32)[:, None, :, :]
    r_tgt = s_abs * jnp.sum(diff * diff, axis=-1) + bias             # (B,T,S)

    # ---- tiling parameters --------------------------------------------------
    in_bytes = jnp.dtype(input_dtype).itemsize if input_dtype is not None else 4
    M = B * T * S
    D_ext = D + 2                               # + [ |s|*||x||^2 , 1 ] features
    D_pad = _round_up(D_ext, 128)

    TT = _round_up(min(row_tile, M), 8)
    if M > 8 and _round_up(M, TT) // TT < 2:
        # keep >= 2 row tiles so both v7x TensorCores get work on the parallel axis
        TT = _round_up((M + 1) // 2, 8)
    M_pad = _round_up(M, TT)
    num_row_tiles = M_pad // TT

    N_128 = _round_up(N, 128)
    if n_block is None:
        # single N block (table resident, DMA'd once for the whole grid) if the
        # double-buffered table fits a v7x-safe VMEM budget; otherwise stream.
        n_block = N_128 if 2 * D_pad * N_128 * in_bytes <= 16 * 1024 * 1024 else 2048
    NB = _round_up(min(n_block, N_128), 128)
    N_pad = _round_up(N, NB)
    num_n_blocks = N_pad // NB

    # ---- wrapper-side data prep (one M*D pass; no transpose of the big tensor)
    x_rows = sv32.reshape(M, D)
    s_xsq = s_abs * jnp.sum(x_rows * x_rows, axis=-1, keepdims=True)   # (M,1) f32
    ones = jnp.ones((M, 1), jnp.float32)
    x_ext = jnp.concatenate([x_rows, s_xsq, ones], axis=-1)            # (M, D+2)
    x_ext = jnp.pad(x_ext, ((0, M_pad - M), (0, D_pad - D_ext)))

    emb = all_speaker_embedding.astype(jnp.float32)                    # (N, D)
    embt = (2.0 * s_abs) * emb.T                                       # (D, N)
    c = s_abs * jnp.sum(emb * emb, axis=-1) + bias                     # (N,)
    emb_ext = jnp.concatenate(
        [embt, -jnp.ones((1, N), jnp.float32), -c[None, :]], axis=0)   # (D+2, N)
    emb_ext = jnp.pad(emb_ext, ((0, D_pad - D_ext), (0, N_pad - N)))
    if N_pad > N:
        # padded speakers -> logit of -1e30 -> exp underflows to 0 (finite, no NaN)
        emb_ext = emb_ext.at[D + 1, N:].set(-1e30)

    if input_dtype is not None:
        # e.g. jnp.bfloat16: halves HBM->VMEM bytes, native bf16 MXU path
        x_ext = x_ext.astype(input_dtype)
        emb_ext = emb_ext.astype(input_dtype)

    # ---- VMEM footprint -> compiler limit (double-buffered inputs + f32 temps)
    vmem_bytes = (2 * TT * D_pad * in_bytes          # x row tiles
                  + 2 * D_pad * NB * in_bytes        # table block(s)
                  + 2 * TT * 4                       # output tile
                  + 2 * TT * 4 * 2                   # m/l scratch
                  + 4 * TT * NB * 4)                 # (TT,NB) f32 intermediates
    vmem_limit = int(min(max(2 * vmem_bytes, 16 * 1024 * 1024), 40 * 1024 * 1024))

    lse_tiles = pl.pallas_call(
        _gcl_lse_kernel,
        out_shape=jax.ShapeDtypeStruct((num_row_tiles, 1, TT), jnp.float32),
        grid=(num_row_tiles, num_n_blocks),
        in_specs=[
            pl.BlockSpec((TT, D_pad), lambda i, k: (i, 0)),     # folded rows
            pl.BlockSpec((D_pad, NB), lambda i, k: (0, k)),     # folded table
        ],
        out_specs=pl.BlockSpec((1, 1, TT), lambda i, k: (i, 0, 0)),
        scratch_shapes=[
            pltpu.VMEM((TT, 1), jnp.float32),   # running max
            pltpu.VMEM((TT, 1), jnp.float32),   # running sum
        ],
        compiler_params=pltpu.CompilerParams(
            dimension_semantics=("parallel", "arbitrary"),
            vmem_limit_bytes=vmem_limit,
        ),
    )(x_ext, emb_ext)

    lse = lse_tiles.reshape(M_pad)[:M].reshape(B, T, S)
    loss = r_tgt + lse                                               # (B, T, S)

    # final tiny reductions (glue)
    if source_reduction == "mean":
        loss = loss.mean(axis=-1)
    elif source_reduction == "sum":
        loss = loss.sum(axis=-1)
    else:
        raise NotImplementedError("Specify source_reduction.")
    if time_mean:
        loss = loss.mean(axis=1)
    if batch_mean:
        loss = loss.mean(axis=0)
    return loss


def _reference_loss(speaker_vector, speaker_embedding, all_speaker_embedding,
                    scale, bias, source_reduction="mean"):
    """Pure-JAX port of the PyTorch forward (feature_last / both means True)."""
    s = jnp.abs(scale)
    d_tgt = jnp.sum(
        (speaker_vector - speaker_embedding[:, None, :, :]) ** 2, axis=-1
    )
    r_tgt = s * d_tgt + bias                                        # (B,T,S)
    d_all = jnp.sum(
        (speaker_vector[..., None, :] - all_speaker_embedding[None, None, None]) ** 2,
        axis=-1,
    )                                                               # (B,T,S,N)
    r_all = s * d_all + bias
    loss = r_tgt + jax.nn.logsumexp(-r_all, axis=3)
    if source_reduction == "mean":
        loss = loss.mean(axis=-1)
    else:
        loss = loss.sum(axis=-1)
    return loss.mean(axis=1).mean(axis=0)


if __name__ == "__main__":
    key = jax.random.PRNGKey(0)

    # ---- test 1: module-sized shapes (n_sources=2, latent=32, 16 speakers)
    B, T, n_sources, D = 2, 8, 2, 32
    n_training_sources = 16
    k1, k2, k3 = jax.random.split(key, 3)
    speaker_vector = jax.random.normal(k1, (B, T, n_sources, D), jnp.float32)
    speaker_embedding = jax.random.normal(k2, (B, n_sources, D), jnp.float32)
    all_speaker_embedding = jax.random.normal(
        k3, (n_training_sources, D), jnp.float32
    )
    scale = jnp.float32(1.0)
    bias = jnp.float32(0.0)

    loss = global_classification_loss(
        speaker_vector, speaker_embedding, all_speaker_embedding, scale, bias
    )
    loss = jax.block_until_ready(loss)
    ref = _reference_loss(
        speaker_vector, speaker_embedding, all_speaker_embedding, scale, bias
    )
    assert loss.shape == ()
    assert jnp.allclose(loss, ref, rtol=1e-3, atol=1e-3), (loss, ref)

    # bf16 streaming smoke test (half the DMA bytes, native bf16 MXU)
    loss_bf16 = global_classification_loss(
        speaker_vector, speaker_embedding, all_speaker_embedding, scale, bias,
        input_dtype=jnp.bfloat16,
    )
    loss_bf16 = jax.block_until_ready(loss_bf16)
    assert jnp.isfinite(loss_bf16)
    assert jnp.abs(loss_bf16 - ref) < 0.1 * jnp.abs(ref) + 0.2, (loss_bf16, ref)

    # ---- test 2: ragged shapes exercising T/D/N padding, multiple N blocks
    #              (online logsumexp) and multiple row tiles
    B2, T2, S2, D2n, N2 = 2, 40, 3, 40, 300
    k4, k5, k6 = jax.random.split(jax.random.PRNGKey(1), 3)
    sv2 = jax.random.normal(k4, (B2, T2, S2, D2n), jnp.float32)
    se2 = jax.random.normal(k5, (B2, S2, D2n), jnp.float32)
    ae2 = jax.random.normal(k6, (N2, D2n), jnp.float32)
    scale2 = jnp.float32(0.7)
    bias2 = jnp.float32(0.3)

    loss2 = global_classification_loss(
        sv2, se2, ae2, scale2, bias2, row_tile=16, n_block=128
    )
    loss2 = jax.block_until_ready(loss2)
    ref2 = _reference_loss(sv2, se2, ae2, scale2, bias2)
    assert loss2.shape == ()
    assert jnp.allclose(loss2, ref2, rtol=1e-3, atol=1e-3), (loss2, ref2)

    print("KERNEL_OK")
</pallas_src>

<mosaic_0001>
module attributes {stable_mosaic.version = 11 : i64} {
  func.func @_gcl_lse_kernel(%arg0: i32, %arg1: i32, %arg2: memref<16x128xf32, #tpu.memory_space<vmem>>, %arg3: memref<128x128xf32, #tpu.memory_space<vmem>>, %arg4: memref<1x1x16xf32, #tpu.memory_space<vmem>>, %arg5: memref<16x1xf32, #tpu.memory_space<vmem>>, %arg6: memref<16x1xf32, #tpu.memory_space<vmem>>) attributes {dimension_semantics = [#tpu.dimension_semantics<parallel>, #tpu.dimension_semantics<arbitrary>], iteration_bounds = array<i64: 2, 1>, scalar_prefetch = 0 : i64, scratch_operands = 2 : i64, tpu.core_type = #tpu.core_type<tc>, window_params = [{transform_indices = @transform_0, window_bounds = array<i64: 16, 128>}, {transform_indices = @transform_1, window_bounds = array<i64: 128, 128>}, {transform_indices = @transform_2, window_bounds = array<i64: 1, 1, 16>}]} {
    %c0_i32 = arith.constant 0 : i32
    %0 = arith.cmpi eq, %arg1, %c0_i32 : i32
    %1 = arith.extui %0 : i1 to i32
    %c0_i32_0 = arith.constant 0 : i32
    %2 = arith.cmpi ne, %1, %c0_i32_0 : i32
    scf.if %2 {
      %cst_16 = arith.constant 0xFF800000 : f32
      %25 = vector.broadcast %cst_16 : f32 to vector<16x1xf32>
      %c0_17 = arith.constant 0 : index
      %c0_18 = arith.constant 0 : index
      %26 = vector.load %arg5[%c0_17, %c0_18] : memref<16x1xf32, #tpu.memory_space<vmem>>, vector<16x1xf32>
      tpu.vector_store %arg5[%c0_17, %c0_18], %25 {strides = array<i32>} : memref<16x1xf32, #tpu.memory_space<vmem>>, vector<16x1xf32>,
      %cst_19 = arith.constant 0.000000e+00 : f32
      %27 = vector.broadcast %cst_19 : f32 to vector<16x1xf32>
      %c0_20 = arith.constant 0 : index
      %c0_21 = arith.constant 0 : index
      %28 = vector.load %arg6[%c0_20, %c0_21] : memref<16x1xf32, #tpu.memory_space<vmem>>, vector<16x1xf32>
      tpu.vector_store %arg6[%c0_20, %c0_21], %27 {strides = array<i32>} : memref<16x1xf32, #tpu.memory_space<vmem>>, vector<16x1xf32>,
    } else {
    }
    %c0 = arith.constant 0 : index
    %c0_1 = arith.constant 0 : index
    %3 = vector.load %arg2[%c0, %c0_1] : memref<16x128xf32, #tpu.memory_space<vmem>>, vector<16x128xf32>
    %c0_2 = arith.constant 0 : index
    %c0_3 = arith.constant 0 : index
    %4 = vector.load %arg3[%c0_2, %c0_3] : memref<128x128xf32, #tpu.memory_space<vmem>>, vector<128x128xf32>
    %cst = arith.constant dense<0.000000e+00> : vector<16x128xf32>
    %5 = tpu.matmul %3, %4, %cst {dimension_numbers = #tpu.dot_dimension_numbers<[1], [0], [0], [1], [0, 0, 1, 1], [], []>} : vector<16x128xf32>, vector<128x128xf32>, vector<16x128xf32> -> vector<16x128xf32>
    %c0_4 = arith.constant 0 : index
    %c0_5 = arith.constant 0 : index
    %6 = vector.load %arg5[%c0_4, %c0_5] : memref<16x1xf32, #tpu.memory_space<vmem>>, vector<16x1xf32>
    %cst_6 = arith.constant dense<0xFF800000> : vector<16xf32>
    %7 = vector.multi_reduction <maximumf>, %5, %cst_6 [1] : vector<16x128xf32> to vector<16xf32>
    %8 = vector.shape_cast %7 : vector<16xf32> to vector<16x1xf32>
    %9 = arith.maximumf %6, %8 : vector<16x1xf32>
    %10 = arith.subf %6, %9 : vector<16x1xf32>
    %11 = math.exp %10 : vector<16x1xf32>
    %c0_7 = arith.constant 0 : index
    %c0_8 = arith.constant 0 : index
    %12 = vector.load %arg6[%c0_7, %c0_8] : memref<16x1xf32, #tpu.memory_space<vmem>>, vector<16x1xf32>
    %13 = arith.mulf %11, %12 : vector<16x1xf32>
    %14 = vector.broadcast %9 : vector<16x1xf32> to vector<16x128xf32>
    %15 = arith.subf %5, %14 : vector<16x128xf32>
    %16 = math.exp %15 : vector<16x128xf32>
    %cst_9 = arith.constant dense<0.000000e+00> : vector<16xf32>
    %17 = vector.multi_reduction <add>, %16, %cst_9 [1] : vector<16x128xf32> to vector<16xf32>
    %18 = vector.shape_cast %17 : vector<16xf32> to vector<16x1xf32>
    %19 = arith.addf %13, %18 : vector<16x1xf32>
    %c0_10 = arith.constant 0 : index
    %c0_11 = arith.constant 0 : index
    %20 = vector.load %arg6[%c0_10, %c0_11] : memref<16x1xf32, #tpu.memory_space<vmem>>, vector<16x1xf32>
    tpu.vector_store %arg6[%c0_10, %c0_11], %19 {strides = array<i32>} : memref<16x1xf32, #tpu.memory_space<vmem>>, vector<16x1xf32>,
    %c0_12 = arith.constant 0 : index
    %c0_13 = arith.constant 0 : index
    %21 = vector.load %arg5[%c0_12, %c0_13] : memref<16x1xf32, #tpu.memory_space<vmem>>, vector<16x1xf32>
    tpu.vector_store %arg5[%c0_12, %c0_13], %9 {strides = array<i32>} : memref<16x1xf32, #tpu.memory_space<vmem>>, vector<16x1xf32>,
    %c0_i32_14 = arith.constant 0 : i32
    %22 = arith.cmpi eq, %arg1, %c0_i32_14 : i32
    %23 = arith.extui %22 : i1 to i32
    %c0_i32_15 = arith.constant 0 : i32
    %24 = arith.cmpi ne, %23, %c0_i32_15 : i32
    scf.if %24 {
      %c0_16 = arith.constant 0 : index
      %c0_17 = arith.constant 0 : index
      %25 = vector.load %arg5[%c0_16, %c0_17] : memref<16x1xf32, #tpu.memory_space<vmem>>, vector<16x1xf32>
      %c0_18 = arith.constant 0 : index
      %c0_19 = arith.constant 0 : index
      %26 = vector.load %arg6[%c0_18, %c0_19] : memref<16x1xf32, #tpu.memory_space<vmem>>, vector<16x1xf32>
      %27 = math.log %26 : vector<16x1xf32>
      %28 = arith.addf %25, %27 : vector<16x1xf32>
      %29 = tpu.transpose %28, [1, 0] : vector<16x1xf32> -> vector<1x16xf32>
      %30 = vector.shape_cast %29 : vector<1x16xf32> to vector<1x1x16xf32>
      %c0_20 = arith.constant 0 : index
      %c0_21 = arith.constant 0 : index
      %c0_22 = arith.constant 0 : index
      %31 = vector.load %arg4[%c0_20, %c0_21, %c0_22] : memref<1x1x16xf32, #tpu.memory_space<vmem>>, vector<1x1x16xf32>
      tpu.vector_store %arg4[%c0_20, %c0_21, %c0_22], %30 {strides = array<i32>} : memref<1x1x16xf32, #tpu.memory_space<vmem>>, vector<1x1x16xf32>,
    } else {
    }
    return
  }
  func.func @transform_0(%arg0: i32, %arg1: i32) -> (i32, i32) {
    %c0_i32 = arith.constant 0 : i32
    %c0_i32_0 = arith.constant 0 : i32
    return %arg0, %c0_i32 : i32, i32
  }
  func.func @transform_1(%arg0: i32, %arg1: i32) -> (i32, i32) {
    %c0_i32 = arith.constant 0 : i32
    %c0_i32_0 = arith.constant 0 : i32
    return %c0_i32, %arg1 : i32, i32
  }
  func.func @transform_2(%arg0: i32, %arg1: i32) -> (i32, i32, i32) {
    %c0_i32 = arith.constant 0 : i32
    %c0_i32_0 = arith.constant 0 : i32
    %c0_i32_1 = arith.constant 0 : i32
    return %arg0, %c0_i32, %c0_i32_0 : i32, i32, i32
  }
}

</mosaic_0001>

<llo_original>
// kernel: tpu_custom_call.1
$region0: #{tpu_custom_call.1}
  #allocation0 [shape = 'u32[]', space=smem, size = 0x4, offset = 0x4, fixed_abs, tag = 'smem constant byte address 0x4 - core index']
  #allocation1 [shape = 'u32[144,128]{1,0:T(1,128)}', space=vmem, size = 0x12000, scoped, tag = 'internal scratch']
  #allocation2 [shape = 'f32[16,1]{1,0:T(8,128)}', space=vmem, size = 0x2000, scoped, tag = 'scratch operand']
  #allocation3 [shape = 'f32[16,1]{1,0:T(8,128)}', space=vmem, size = 0x2000, scoped, tag = 'scratch operand']
  %s0 = inlined_call_operand.hbm [shape: f32[32,128], index: 0, kind: input, shape index: {}]
  %s1 = inlined_call_operand.hbm [shape: f32[128,128], index: 1, kind: input, shape index: {}]
  %s2 = inlined_call_operand.hbm [shape: f32[2,1,16], index: 2, kind: output, shape index: {}]
  %s3 = sld [smem:[#allocation0]]
  $region57: #{tpu_custom_call.1} parent=0
    _
  %s5 = ssub.s32 1, %s3
  %s6 = scalar_select 0, %s5, %s3
  $region1: #{tpu_custom_call.1} parent=0
    #allocation4 [shape = 'u8[16384]{0}', space=vmem, size = 0x4000, scoped, tag = 'input window, operand 0']
    #allocation5 [shape = 's32[2]{0}', space=sflag, size = 0x8, scoped, tag = 'scoped memory for tpu_custom_call.1']
    #allocation6 [shape = 's32[2]{0}', space=sflag, size = 0x8, scoped, tag = 'scoped memory for tpu_custom_call.1']
    #allocation7 [shape = 'u8[65536]{0}', space=vmem, size = 0x10000, scoped, tag = 'input window, operand 1, single buffered']
    #allocation8 [shape = 's32[1]{0}', space=sflag, size = 0x4, scoped, tag = 'scoped memory for tpu_custom_call.1']
    #allocation9 [shape = 'u8[1024]{0}', space=vmem, size = 0x400, scoped, tag = 'output window, operand 0']
    %7 = vsyncpa [#allocation5], 0
    %s8 = scalar_lea.sflag [#allocation5], 1
    %9 = vsyncpa %s8, 0
    %10 = vsyncpa [#allocation8], 0
    %11 = vsyncpa [#allocation6], 0
    %s12 = scalar_lea.sflag [#allocation6], 1
    %13 = vsyncpa %s12, 0
    loop: start=0, step=1, limit=4
    $region2: #{tpu_custom_call.1} parent=1 // loop_pre_header
      _
    $region3: #{tpu_custom_call.1} parent=1 // loop_header
      %s15 = sphi 0, %s19
      %p16 = scmp.ge.s32.totalorder %s15, 4
      %s22 = sphi 0, %s34
      %s23 = sphi 0, %s30
      %s24 = sphi 0, %s22
      %s25 = sphi 0, %s23
      %s26 = sphi 0, %s24
      %s27 = sphi 0, %s25
      %s37 = sphi 0, %s39
      %s40 = sphi 0, %s37
      %s41 = sphi 0, %s40
      %s57 = sphi 0, %s41
      %s63 = sphi 0, %s65
      %s66 = sphi 0, %s63
      %s67 = sphi 0, %s66
      %s83 = sphi 0, %s67
      %s89 = sphi 0, %s91
      %s92 = sphi 0, %s89
      %s93 = sphi 0, %s92
      %s109 = sphi 0, %s93
    $region4: #{tpu_custom_call.1} parent=1 // loop_header_branch
      %18 = sbr.rel (%p16) target = $region8
    $region5: #{tpu_custom_call.1} parent=1 // loop_body
      %s20 = ssub.s32 %s15, 1
      %s21 = ssub.s32 %s15, 2
      %s28 = sadd.s32 1, %s23
      %p29 = scmp.ge.s32.totalorder %s28, 1
      %s30 = scalar_select %p29, 0, %s28
      %s31 = sadd.s32 1, %s22
      %s32 = scalar_select %p29, %s31, %s22
      %p33 = scmp.ge.s32.totalorder %s32, 2
      %s34 = scalar_select %p33, 0, %s32
      %s35 = ssub.s32 %s22, %s34
      %p36 = scmp.eq.s32.totalorder %s35, 0
      %s38 = sadd.s32 %s37, 1
      %s39 = scalar_select %p36, %s37, %s38
      %p42 = pneg %p36
      %p43 = scmp.eq.s32.totalorder %s15, 1
      %p44 = por %p42, %p43
      %p45 = scmp.ne.s32.totalorder %s37, %s40
      %p46 = scmp.eq.s32.totalorder %s15, 0
      %p47 = por %p45, %p46
      %p48 = scmp.ne.s32.totalorder %s37, %s40
      %p49 = scmp.eq.s32.totalorder %s20, 1
      %p50 = por %p48, %p49
      %p51 = scmp.ne.s32.totalorder %s40, %s41
      %p52 = scmp.eq.s32.totalorder %s20, 0
      %p53 = por %p51, %p52
      %p54 = scmp.ne.s32.totalorder %s40, %s41
      %p55 = scmp.eq.s32.totalorder %s21, 1
      %p56 = por %p54, %p55
      %p58 = scmp.ne.s32.totalorder %s41, %s57
      %p59 = scmp.eq.s32.totalorder %s21, 0
      %p60 = por %p58, %p59
      %s61 = ssub.s32 %s23, %s30
      %p62 = scmp.eq.s32.totalorder %s61, 0
      %s64 = sadd.s32 %s63, 1
      %s65 = scalar_select %p62, %s63, %s64
      %p68 = pneg %p62
      %p69 = scmp.eq.s32.totalorder %s15, 1
      %p70 = por %p68, %p69
      %p71 = scmp.ne.s32.totalorder %s63, %s66
      %p72 = scmp.eq.s32.totalorder %s15, 0
      %p73 = por %p71, %p72
      %p74 = scmp.ne.s32.totalorder %s63, %s66
      %p75 = scmp.eq.s32.totalorder %s20, 1
      %p76 = por %p74, %p75
      %p77 = scmp.ne.s32.totalorder %s66, %s67
      %p78 = scmp.eq.s32.totalorder %s20, 0
      %p79 = por %p77, %p78
      %p80 = scmp.ne.s32.totalorder %s66, %s67
      %p81 = scmp.eq.s32.totalorder %s21, 1
      %p82 = por %p80, %p81
      %p84 = scmp.ne.s32.totalorder %s67, %s83
      %p85 = scmp.eq.s32.totalorder %s21, 0
      %p86 = por %p84, %p85
      %s87 = ssub.s32 %s22, %s34
      %p88 = scmp.eq.s32.totalorder %s87, 0
      %s90 = sadd.s32 %s89, 1
      %s91 = scalar_select %p88, %s89, %s90
      %p94 = pneg %p88
      %p95 = scmp.eq.s32.totalorder %s15, 1
      %p96 = por %p94, %p95
      %p97 = scmp.ne.s32.totalorder %s89, %s92
      %p98 = scmp.eq.s32.totalorder %s15, 0
      %p99 = por %p97, %p98
      %p100 = scmp.ne.s32.totalorder %s89, %s92
      %p101 = scmp.eq.s32.totalorder %s20, 1
      %p102 = por %p100, %p101
      %p103 = scmp.ne.s32.totalorder %s92, %s93
      %p104 = scmp.eq.s32.totalorder %s20, 0
      %p105 = por %p103, %p104
      %p106 = scmp.ne.s32.totalorder %s92, %s93
      %p107 = scmp.eq.s32.totalorder %s21, 1
      %p108 = por %p106, %p107
      %p110 = scmp.ne.s32.totalorder %s93, %s109
      %p111 = scmp.eq.s32.totalorder %s21, 0
      %p112 = por %p110, %p111
      %p113 = scmp.le.s32.totalorder 1, %s15
      %p114 = scmp.lt.s32.totalorder %s15, 3
      %p115 = pnand %p113, %p114
      %p116 = pneg %p115
      // Predicated region
      $region9: #{tpu_custom_call.1} parent=5 // pred_check
        _
      $region10: #{tpu_custom_call.1} parent=5 // pred_check_branch
        %118 = sbr.rel (%p115) target = $region12
      $region11: #{tpu_custom_call.1} parent=5 // pred_region
        %s119 = ssub.s32 %s15, 1
        // Predicated region
        $region13: #{tpu_custom_call.1} parent=11 // pred_check
          %p120 = pneg %p79
        $region14: #{tpu_custom_call.1} parent=11 // pred_check_branch
          %122 = sbr.rel (%p120) target = $region16
        $region15: #{tpu_custom_call.1} parent=11 // pred_region
          %s124 = ssub.s32 2048, 2048
          %125 = vsyncadd [#allocation8], %s124
          %s126 = smul.addr %s25, 128
          %s127 = scalar_lea.hbm %s1, %s126
          %s128 = sshll.u32 [#allocation7], 4
          %s129 = int_to_ptr.vmem [resolvable:$true] %s128
          %134 = dma.hbm_to_vmem [thread:$0]  %s127, 2048, %s129, [#allocation8], 128, 128, 8
        $region16: #{tpu_custom_call.1} parent=11 // pred_fallthru
          _
      $region12: #{tpu_custom_call.1} parent=5 // pred_fallthru
        _
      %p135 = scmp.lt.s32.totalorder %s15, 2
      // Predicated region
      $region17: #{tpu_custom_call.1} parent=5 // pred_check
        %p136 = pneg %p135
      $region18: #{tpu_custom_call.1} parent=5 // pred_check_branch
        %138 = sbr.rel (%p136) target = $region20
      $region19: #{tpu_custom_call.1} parent=5 // pred_region
        // Predicated region
        $region21: #{tpu_custom_call.1} parent=19 // pred_check
          %p139 = pneg %p47
        $region22: #{tpu_custom_call.1} parent=19 // pred_check_branch
          %141 = sbr.rel (%p139) target = $region24
        $region23: #{tpu_custom_call.1} parent=19 // pred_region
          %s142 = sand.u32 %s37, 1
          %s143 = scalar_lea.sflag [#allocation5], %s142
          %s144 = sand.u32 %s37, 1
          %s145 = smul.addr %s144, 16
          %s146 = scalar_lea.vmem [#allocation4], %s145
          %s147 = smul.u32 2, %s22
          %s149 = ssub.s32 256, 256
          %150 = vsyncadd %s143, %s149
          %s151 = smul.addr %s147, 128
          %s152 = scalar_lea.hbm %s0, %s151
          %s153 = sshll.u32 %s146, 4
          %s154 = int_to_ptr.vmem [resolvable:$true] %s153
          %159 = dma.hbm_to_vmem [thread:$0]  %s152, 256, %s154, %s143, 128, 128, 8
        $region24: #{tpu_custom_call.1} parent=19 // pred_fallthru
          _
      $region20: #{tpu_custom_call.1} parent=5 // pred_fallthru
        _
      %p160 = scmp.le.s32.totalorder 1, %s15
      %p161 = scmp.lt.s32.totalorder %s15, 3
      %p162 = pnand %p160, %p161
      %p163 = pneg %p162
      // Predicated region
      $region25: #{tpu_custom_call.1} parent=5 // pred_check
        _
      $region26: #{tpu_custom_call.1} parent=5 // pred_check_branch
        %165 = sbr.rel (%p162) target = $region28
      $region27: #{tpu_custom_call.1} parent=5 // pred_region
        %s166 = ssub.s32 %s15, 1
        %s167 = sand.u32 %s40, 1
        %s168 = scalar_lea.sflag [#allocation5], %s167
        %s169 = sand.u32 %s40, 1
        %s170 = smul.addr %s169, 16
        %s171 = scalar_lea.vmem [#allocation4], %s170
        // Predicated region
        $region29: #{tpu_custom_call.1} parent=27 // pred_check
          %p172 = pneg %p53
        $region30: #{tpu_custom_call.1} parent=27 // pred_check_branch
          %174 = sbr.rel (%p172) target = $region32
        $region31: #{tpu_custom_call.1} parent=27 // pred_region
          %175 = dma.done %s168, 256
        $region32: #{tpu_custom_call.1} parent=27 // pred_fallthru
          _
        // Predicated region
        $region33: #{tpu_custom_call.1} parent=27 // pred_check
          %p176 = pneg %p79
        $region34: #{tpu_custom_call.1} parent=27 // pred_check_branch
          %178 = sbr.rel (%p176) target = $region36
        $region35: #{tpu_custom_call.1} parent=27 // pred_region
          %179 = dma.done [#allocation8], 2048
        $region36: #{tpu_custom_call.1} parent=27 // pred_fallthru
          _
        %s180 = sand.u32 %s40, 1
        %s181 = scalar_lea.sflag [#allocation5], %s180
        %s182 = sand.u32 %s40, 1
        %s183 = smul.addr %s182, 16
        %s184 = scalar_lea.vmem [#allocation4], %s183
        %p185 = pneg %p53
        %p186 = pneg %p50
        %p187 = pneg %p79
        %p188 = pneg %p76
        %p189 = pneg %p105
        %p190 = pneg %p102
        %s191 = sand.u32 %s92, 1
        %s192 = scalar_lea.sflag [#allocation6], %s191
        %s193 = sand.u32 %s92, 1
        %s194 = scalar_lea.vmem [#allocation9], %s193
        %s195 = smul.u32 2, %s24
        %p196 = scmp.eq.s32.totalorder %s25, 0
        // Predicated region
        $region37: #{tpu_custom_call.1} parent=27 // pred_check
          %p197 = pneg %p196
        $region38: #{tpu_custom_call.1} parent=27 // pred_check_branch
          %199 = sbr.rel (%p197) target = $region40
        $region39: #{tpu_custom_call.1} parent=27 // pred_region
          %vm200 = vcmask 7168
          %201 = vst.msk [vmem:[#allocation2] sm:$0xff] %vm200, -inf
          %202 = vst.msk [vmem:[#allocation2 + $0x8] sm:$0xff] %vm200, -inf
          %203 = vst.msk [vmem:[#allocation3] sm:$0xff] %vm200, 0.0
          %204 = vst.msk [vmem:[#allocation3 + $0x8] sm:$0xff] %vm200, 0.0
        $region40: #{tpu_custom_call.1} parent=27 // pred_fallthru
          _
        %v205 = vld [vmem:[%s171] sm:$0xff]
        %v206 = vld [vmem:[%s171 + $0x8] sm:$0xff]
        %v207 = vld [vmem:[#allocation7] sm:$0xff]
        %v208 = vld [vmem:[#allocation7 + $0x8] sm:$0xff]
        %v209 = vld [vmem:[#allocation7 + $0x10] sm:$0xff]
        %v210 = vld [vmem:[#allocation7 + $0x18] sm:$0xff]
        %v211 = vld [vmem:[#allocation7 + $0x20] sm:$0xff]
        %v212 = vld [vmem:[#allocation7 + $0x28] sm:$0xff]
        %v213 = vld [vmem:[#allocation7 + $0x30] sm:$0xff]
        %v214 = vld [vmem:[#allocation7 + $0x38] sm:$0xff]
        %v215 = vld [vmem:[#allocation7 + $0x40] sm:$0xff]
        %v216 = vld [vmem:[#allocation7 + $0x48] sm:$0xff]
        %v217 = vld [vmem:[#allocation7 + $0x50] sm:$0xff]
        %v218 = vld [vmem:[#allocation7 + $0x58] sm:$0xff]
        %v219 = vld [vmem:[#allocation7 + $0x60] sm:$0xff]
        %v220 = vld [vmem:[#allocation7 + $0x68] sm:$0xff]
        %v221 = vld [vmem:[#allocation7 + $0x70] sm:$0xff]
        %v222 = vld [vmem:[#allocation7 + $0x78] sm:$0xff]
        %223 = vmatprep.subr.mxu0 0.0
        %224 = vmatpush1.msra.mxu0 %v222
        %225 = vmatprep.subr.mxu0 0.0
        %226 = vmatpush1.msra.mxu0 %v221
        %227 = vmatprep.subr.mxu0 0.0
        %228 = vmatpush1.msra.mxu0 %v220
        %229 = vmatprep.subr.mxu0 0.0
        %230 = vmatpush1.msra.mxu0 %v219
        %231 = vmatprep.subr.mxu0 0.0
        %232 = vmatpush1.msra.mxu0 %v218
        %233 = vmatprep.subr.mxu0 0.0
        %234 = vmatpush1.msra.mxu0 %v217
        %235 = vmatprep.subr.mxu0 0.0
        %236 = vmatpush1.msra.mxu0 %v216
        %237 = vmatprep.subr.mxu0 0.0
        %238 = vmatpush1.msra.mxu0 %v215
        %239 = vmatprep.subr.mxu0 0.0
        %240 = vmatpush1.msra.mxu0 %v214
        %241 = vmatprep.subr.mxu0 0.0
        %242 = vmatpush1.msra.mxu0 %v213
        %243 = vmatprep.subr.mxu0 0.0
        %244 = vmatpush1.msra.mxu0 %v212
        %245 = vmatprep.subr.mxu0 0.0
        %246 = vmatpush1.msra.mxu0 %v211
        %247 = vmatprep.subr.mxu0 0.0
        %248 = vmatpush1.msra.mxu0 %v210
        %249 = vmatprep.subr.mxu0 0.0
        %250 = vmatpush1.msra.mxu0 %v209
        %251 = vmatprep.subr.mxu0 0.0
        %252 = vmatpush1.msra.mxu0 %v208
        %253 = vmatprep.subr.mxu0 0.0
        %254 = vmatpush1.msra.mxu0 %v207
        %255 = vmatprep.subr.mxu0 0.0
        %256 = vmatpush2.msra.mxu0 0.0
        %257 = vmatprep.subr.mxu0 0.0
        %258 = vmatpush2.msra.mxu0 0.0
        %259 = vmatprep.subr.mxu0 0.0
        %260 = vmatpush2.msra.mxu0 0.0
        %261 = vmatprep.subr.mxu0 0.0
        %262 = vmatpush2.msra.mxu0 0.0
        %263 = vmatprep.subr.mxu0 0.0
        %264 = vmatpush2.msra.mxu0 0.0
        %265 = vmatprep.subr.mxu0 0.0
        %266 = vmatpush2.msra.mxu0 0.0
        %267 = vmatprep.subr.mxu0 0.0
        %268 = vmatpush2.msra.mxu0 0.0
        %269 = vmatprep.subr.mxu0 0.0
        %270 = vmatpush2.msra.mxu0 0.0
        %271 = vmatprep.subr.mxu0 0.0
        %272 = vmatpush2.msra.mxu0 0.0
        %273 = vmatprep.subr.mxu0 0.0
        %274 = vmatpush2.msra.mxu0 0.0
        %275 = vmatprep.subr.mxu0 0.0
        %276 = vmatpush2.msra.mxu0 0.0
        %277 = vmatprep.subr.mxu0 0.0
        %278 = vmatpush2.msra.mxu0 0.0
        %279 = vmatprep.subr.mxu0 0.0
        %280 = vmatpush2.msra.mxu0 0.0
        %281 = vmatprep.subr.mxu0 0.0
        %282 = vmatpush2.msra.mxu0 0.0
        %283 = vmatprep.subr.mxu0 0.0
        %284 = vmatpush2.msra.mxu0 0.0
        %285 = vmatprep.subr.mxu0 0.0
        %286 = vmatpush2.msra.mxu0 0.0
        %287 = vmatprep.mubr.f32.mxu0 0.0
        %288 = vmatmul.mubr.f32.gmra.mxu0 %v205
        %v289 = vpop.f32.mrf.mxu0
        %v290 = vadd.f32 0.0, %v289
        %v291 = vpop.f32.mrf.mxu0
        %292 = vmatprep.mubr.f32.mxu0 0.0
        %293 = vmatmul.mubr.f32.gmra.mxu0 %v206
        %v294 = vpop.f32.mrf.mxu0
        %v295 = vadd.f32 0.0, %v294
        %v296 = vpop.f32.mrf.mxu0
        %297 = vdwg.mxu0
        %v298 = vld [vmem:[#allocation2] sm:$0xff]
        %v299 = vld [vmem:[#allocation2 + $0x8] sm:$0xff]
        %300 = vmax.xlane.f32.xlu0 %v290
        %v301 = vpop.xlane.xlu0 %300
        %302 = vmax.xlane.f32.xlu0 %v295
        %v303 = vpop.xlane.xlu0 %302
        %v304 = vmax.f32 %v298, %v301
        %v305 = vmax.f32 %v299, %v303
        %v306 = vsub.f32 %v298, %v304
        %v307 = vsub.f32 %v299, %v305
        %v308 = vmul.f32 %v306, 1.442695
        %v309 = vpow.pop %v308
        %v310 = vmul.f32 %v307, 1.442695
        %v311 = vpow.pop %v310
        %v312 = vld [vmem:[#allocation3] sm:$0xff]
        %v313 = vld [vmem:[#allocation3 + $0x8] sm:$0xff]
        %v314 = vmul.f32 %v309, %v312
        %v315 = vmul.f32 %v311, %v313
        %317 = vset.pattern.permute.xlu0 0
        %318 = vperm.xlu0 %317, %v304
        %v319 = vpop.permute.xlu0 %318
        %322 = vset.pattern.permute.xlu0 0
        %323 = vperm.xlu0 %322, %v305
        %v324 = vpop.permute.xlu0 %323
        %v326 = vsub.f32 %v290, %v319
        %v327 = vsub.f32 %v295, %v324
        %v328 = vmul.f32 %v326, 1.442695
        %v329 = vpow.pop %v328
        %v330 = vmul.f32 %v327, 1.442695
        %v331 = vpow.pop %v330
        %332 = vadd.xlane.f32.xlu0 %v329
        %v333 = vpop.xlane.xlu0 %332
        %334 = vadd.xlane.f32.xlu0 %v331
        %v335 = vpop.xlane.xlu0 %334
        %v336 = vadd.f32 %v314, %v333
        %v337 = vadd.f32 %v315, %v335
        %vm338 = vcmask 7168
        %339 = vst.msk [vmem:[#allocation3] sm:$0xff] %vm338, %v336
        %340 = vst.msk [vmem:[#allocation3 + $0x8] sm:$0xff] %vm338, %v337
        %341 = vst.msk [vmem:[#allocation2] sm:$0xff] %vm338, %v304
        %342 = vst.msk [vmem:[#allocation2 + $0x8] sm:$0xff] %vm338, %v305
        // Predicated region
        $region41: #{tpu_custom_call.1} parent=27 // pred_check
          %p343 = pneg %p196
        $region42: #{tpu_custom_call.1} parent=27 // pred_check_branch
          %345 = sbr.rel (%p343) target = $region44
        $region43: #{tpu_custom_call.1} parent=27 // pred_region
          %v346 = vld [vmem:[#allocation2] sm:$0xff]
          %v347 = vld [vmem:[#allocation2 + $0x8] sm:$0xff]
          %v348 = vld [vmem:[#allocation3] sm:$0xff]
          %v349 = vld [vmem:[#allocation3 + $0x8] sm:$0xff]
          %v350 = vlog2.pop %v348
          %v351 = vmul.f32 %v350, 0.6931472
          %v352 = vlog2.pop %v349
          %v353 = vmul.f32 %v352, 0.6931472
          %v354 = vadd.f32 %v346, %v351
          %v355 = vadd.f32 %v347, %v353
          %356 = vxpose.xlu0.b32.start [1/16] %v354, 128
          %357 = vxpose.xlu0.b32.cont [2/16] %v355, 128
          %358 = vxpose.xlu0.b32.cont [3/16] 0.0, 128
          %359 = vxpose.xlu0.b32.cont [4/16] 0.0, 128
          %360 = vxpose.xlu0.b32.cont [5/16] 0.0, 128
          %361 = vxpose.xlu0.b32.cont [6/16] 0.0, 128
          %362 = vxpose.xlu0.b32.cont [7/16] 0.0, 128
          %363 = vxpose.xlu0.b32.cont [8/16] 0.0, 128
          %364 = vxpose.xlu0.b32.cont [9/16] 0.0, 128
          %365 = vxpose.xlu0.b32.cont [10/16] 0.0, 128
          %366 = vxpose.xlu0.b32.cont [11/16] 0.0, 128
          %367 = vxpose.xlu0.b32.cont [12/16] 0.0, 128
          %368 = vxpose.xlu0.b32.cont [13/16] 0.0, 128
          %369 = vxpose.xlu0.b32.cont [14/16] 0.0, 128
          %370 = vxpose.xlu0.b32.cont [15/16] 0.0, 128
          %371 = vxpose.xlu0.b32.end [16/16] 0.0, 128
          %v372 = vpop.trf.xlu0
          %v373 = vpop.trf.xlu0
          %v374 = vpop.trf.xlu0
          %v375 = vpop.trf.xlu0
          %v376 = vpop.trf.xlu0
          %v377 = vpop.trf.xlu0
          %v378 = vpop.trf.xlu0
          %v379 = vpop.trf.xlu0
          %v380 = vpop.trf.xlu0
          %v381 = vpop.trf.xlu0
          %v382 = vpop.trf.xlu0
          %v383 = vpop.trf.xlu0
          %v384 = vpop.trf.xlu0
          %v385 = vpop.trf.xlu0
          %v386 = vpop.trf.xlu0
          %v387 = vpop.trf.xlu0
          %vm388 = vcmask 122880
          %389 = vst.msk [vmem:[%s194] sm:$0x1] %vm388, %v372
        $region44: #{tpu_custom_call.1} parent=27 // pred_fallthru
          _
        %s390 = sand.u32 %s92, 1
        %s391 = scalar_lea.sflag [#allocation6], %s390
        %s392 = sand.u32 %s92, 1
        %s393 = scalar_lea.vmem [#allocation9], %s392
        // Predicated region
        $region45: #{tpu_custom_call.1} parent=27 // pred_check
          %p394 = pneg %p102
        $region46: #{tpu_custom_call.1} parent=27 // pred_check_branch
          %396 = sbr.rel (%p394) target = $region48
        $region47: #{tpu_custom_call.1} parent=27 // pred_region
          %s398 = ssub.s32 16, 16
          %399 = vsyncadd %s391, %s398
          %s400 = smul.addr %s24, 16
          %s401 = scalar_lea.hbm %s2, %s400
          %s403 = sshll.u32 %s393, 4
          %s404 = int_to_ptr.vmem [resolvable:$true] %s403
          %406 = dma.vmem_to_hbm [thread:$0]  %s404, 16, %s401, %s391
        $region48: #{tpu_custom_call.1} parent=27 // pred_fallthru
          _
      $region28: #{tpu_custom_call.1} parent=5 // pred_fallthru
        _
      %p407 = scmp.le.s32.totalorder 2, %s15
      // Predicated region
      $region49: #{tpu_custom_call.1} parent=5 // pred_check
        %p408 = pneg %p407
      $region50: #{tpu_custom_call.1} parent=5 // pred_check_branch
        %410 = sbr.rel (%p408) target = $region52
      $region51: #{tpu_custom_call.1} parent=5 // pred_region
        %s411 = ssub.s32 %s15, 2
        // Predicated region
        $region53: #{tpu_custom_call.1} parent=51 // pred_check
          %p412 = pneg %p108
        $region54: #{tpu_custom_call.1} parent=51 // pred_check_branch
          %414 = sbr.rel (%p412) target = $region56
        $region55: #{tpu_custom_call.1} parent=51 // pred_region
          %s415 = sand.u32 %s93, 1
          %s416 = scalar_lea.sflag [#allocation6], %s415
          %s417 = sand.u32 %s93, 1
          %s418 = scalar_lea.vmem [#allocation9], %s417
          %419 = dma.done %s416, 16
        $region56: #{tpu_custom_call.1} parent=51 // pred_fallthru
          _
      $region52: #{tpu_custom_call.1} parent=5 // pred_fallthru
        _
    $region6: #{tpu_custom_call.1} parent=1 // loop_footer
      %s19 = sadd.s32 1, %s15
    $region7: #{tpu_custom_call.1} parent=1 // loop_footer_branch
      %14 = sbr.rel target = $region3
    $region8: #{tpu_custom_call.1} parent=1 // loop_exit
      _
    %420 = vsyncpa [#allocation5], 1
    %s421 = scalar_lea.sflag [#allocation5], 1
    %422 = vsyncpa %s421, 1
    %423 = vsyncpa [#allocation8], 1
    %424 = vsyncpa [#allocation6], 1
    %s425 = scalar_lea.sflag [#allocation6], 1
    %426 = vsyncpa %s425, 1

</llo_original>
